<compile_context>
chip_gen: v5e
topology: v5e:2x2
jax: 0.10.0
libtpu: 0.0.40
codegen_flags: <defaults>
</compile_context>

<pallas_src>
import functools
import math

import jax
import jax.numpy as jnp
from jax import lax
from jax.experimental import pallas as pl
from jax.experimental.pallas import tpu as pltpu


def _arcmargin_kernel(x_ref, w_ref, label_ref, o_ref, *,
                      cos_m, sin_m, th, mm, s, ls_eps, easy_margin,
                      num_out_feats, tile_c):
    x = x_ref[...]                 # (B, D)       f32, resident
    w = w_ref[...]                 # (TILE_C, D)  f32, streamed per grid step
    label = label_ref[...]         # (B, 1)       i32, resident

    d = x.shape[-1]

    # 1 / max(||x||, 1e-12) per row, as rsqrt of the clamped squared norm (EUP).
    x_sumsq = jnp.sum(x * x, axis=-1, keepdims=True)                    # (B, 1)
    x_rs = lax.rsqrt(jnp.maximum(x_sumsq, 1e-24))                       # (B, 1)

    # Per-class 1 / max(||w||, 1e-12), produced directly in lane-dense
    # (1, TILE_C) layout via a ones-row matmul (MXU is otherwise idle here).
    w_sq = w * w                                                        # (TILE_C, D)
    ones_row = jnp.ones((1, d), dtype=jnp.float32)
    w_sumsq = lax.dot_general(ones_row, w_sq, (((1,), (1,)), ((), ())),
                              preferred_element_type=jnp.float32)       # (1, TILE_C)
    w_rs = lax.rsqrt(jnp.maximum(w_sumsq, 1e-24))                       # (1, TILE_C)

    # cosine = normalize(x) @ normalize(w).T, computed as a raw matmul on the
    # MXU (contract last dims of both operands -> no transpose) with the two
    # normalization factors folded in afterwards (B x TILE_C multiplies only).
    raw = lax.dot_general(x, w, (((1,), (1,)), ((), ())),
                          preferred_element_type=jnp.float32)           # (B, TILE_C)
    cosine = raw * x_rs * w_rs

    # sine = sqrt(1 - cos^2), clamped so float rounding (|cos| slightly > 1)
    # never produces NaN.
    sine = jnp.sqrt(jnp.maximum(1.0 - cosine * cosine, 0.0))
    phi = cosine * cos_m - sine * sin_m
    if easy_margin:
        phi = jnp.where(cosine > 0.0, phi, cosine)
    else:
        phi = jnp.where(cosine > th, phi, cosine - mm)

    # One-hot against the *global* class id of this tile.
    base = pl.program_id(0) * tile_c
    class_ids = base + lax.broadcasted_iota(jnp.int32, cosine.shape, 1)  # (B, TILE_C)
    is_target = class_ids == label                                       # (B,1) bcast

    if ls_eps > 0.0:
        one_hot = (1.0 - ls_eps) * is_target.astype(jnp.float32) + ls_eps / num_out_feats
        out = one_hot * phi + (1.0 - one_hot) * cosine
    else:
        out = jnp.where(is_target, phi, cosine)

    o_ref[...] = (out * s).astype(o_ref.dtype)


def _round_up(a, b):
    return -(-a // b) * b


def _vmem_limit_bytes(b, d, tile_c):
    f32 = 4
    est = (2 * tile_c * d        # double-buffered weight tile
           + 2 * b * tile_c      # double-buffered output tile
           + 2 * b * d           # input block
           + 2 * 8 * 128         # padded label block
           + tile_c * d          # w*w intermediate
           + 8 * b * tile_c      # cosine/sine/phi/iota intermediates
           ) * f32
    return int(min(max(2 * est, 16 * 1024 * 1024), 48 * 1024 * 1024))


def arc_margin_product(x, weight, label, *, s=30.0, m=0.5,
                       easy_margin=False, ls_eps=0.0, tile_c=512):
    """x: (B, D) f32, weight: (C, D) f32, label: (B,) int -> (B, C) f32."""
    B, D = x.shape
    C, D2 = weight.shape
    assert D == D2
    label2d = label.reshape(B, 1).astype(jnp.int32)

    # Class-tile size: multiple of 128, generation-safe VMEM footprint.
    tile_c = max(128, min(tile_c, _round_up(C, 128)))
    assert tile_c % 128 == 0

    # Pad C up to a multiple of tile_c (zero rows -> cosine 0, never selected
    # by the one-hot since real labels are < C); slice the result back.
    C_pad = _round_up(C, tile_c)
    if C_pad != C:
        weight = jnp.pad(weight, ((0, C_pad - C), (0, 0)))
    num_tiles = C_pad // tile_c

    kernel = functools.partial(
        _arcmargin_kernel,
        cos_m=math.cos(m),
        sin_m=math.sin(m),
        th=math.cos(math.pi - m),
        mm=math.sin(math.pi - m) * m,
        s=s,
        ls_eps=ls_eps,
        easy_margin=easy_margin,
        num_out_feats=C,
        tile_c=tile_c,
    )

    out = pl.pallas_call(
        kernel,
        out_shape=jax.ShapeDtypeStruct((B, C_pad), jnp.float32),
        grid_spec=pltpu.PrefetchScalarGridSpec(
            num_scalar_prefetch=0,
            grid=(num_tiles,),
            in_specs=[
                pl.BlockSpec((B, D), lambda i: (0, 0)),        # x (resident)
                pl.BlockSpec((tile_c, D), lambda i: (i, 0)),   # W tile (streamed)
                pl.BlockSpec((B, 1), lambda i: (0, 0)),        # label (resident)
            ],
            out_specs=pl.BlockSpec((B, tile_c), lambda i: (0, i)),
        ),
        compiler_params=pltpu.CompilerParams(
            dimension_semantics=("parallel",),                 # independent class tiles
            vmem_limit_bytes=_vmem_limit_bytes(B, D, tile_c),
        ),
    )(x, weight, label2d)

    return out[:, :C] if C_pad != C else out


if __name__ == "__main__":
    # Small shapes consistent with the module: batch=8, in_features=32,
    # out_features(classes)=1024 with TILE_C=256 so the class grid is exercised.
    B, IN_FEATS, OUT_FEATS = 8, 32, 1024
    TILE_C = 256

    key = jax.random.PRNGKey(0)
    kx, kw, kl = jax.random.split(key, 3)

    x = jax.random.normal(kx, (B, IN_FEATS), dtype=jnp.float32)

    # Deterministic xavier_uniform_ init for weight (C, D):
    bound = math.sqrt(6.0 / (IN_FEATS + OUT_FEATS))
    weight = jax.random.uniform(
        kw, (OUT_FEATS, IN_FEATS), dtype=jnp.float32,
        minval=-bound, maxval=bound)

    label = jax.random.randint(kl, (B,), 0, OUT_FEATS, dtype=jnp.int32)

    out = arc_margin_product(x, weight, label, s=30.0, m=0.5,
                             easy_margin=False, ls_eps=0.0, tile_c=TILE_C)
    jax.block_until_ready(out)

    # Pure-JAX reference faithful to the PyTorch forward (normalize-then-dot).
    def ref(x, w, label, s=30.0, m=0.5, easy_margin=False, ls_eps=0.0):
        xn = x / jnp.maximum(jnp.linalg.norm(x, axis=1, keepdims=True), 1e-12)
        wn = w / jnp.maximum(jnp.linalg.norm(w, axis=1, keepdims=True), 1e-12)
        cosine = xn @ wn.T
        sine = jnp.sqrt(jnp.maximum(1.0 - cosine ** 2, 0.0))
        phi = cosine * math.cos(m) - sine * math.sin(m)
        if easy_margin:
            phi = jnp.where(cosine > 0, phi, cosine)
        else:
            phi = jnp.where(cosine > math.cos(math.pi - m),
                            phi, cosine - math.sin(math.pi - m) * m)
        one_hot = jax.nn.one_hot(label, OUT_FEATS, dtype=jnp.float32)
        if ls_eps > 0:
            one_hot = (1 - ls_eps) * one_hot + ls_eps / OUT_FEATS
        return (one_hot * phi + (1.0 - one_hot) * cosine) * s

    expected = ref(x, weight, label)
    # Norm folding changes rounding order slightly vs F.normalize; allow ~1e-3.
    max_err = float(jnp.max(jnp.abs(out - expected)))
    assert max_err < 1e-3, max_err

    print("KERNEL_OK")
</pallas_src>

<mosaic_0001>
module attributes {stable_mosaic.version = 11 : i64} {
  func.func @_arcmargin_kernel(%arg0: i32, %arg1: memref<8x32xf32, #tpu.memory_space<vmem>>, %arg2: memref<256x32xf32, #tpu.memory_space<vmem>>, %arg3: memref<8x1xi32, #tpu.memory_space<vmem>>, %arg4: memref<8x256xf32, #tpu.memory_space<vmem>>) attributes {dimension_semantics = [#tpu.dimension_semantics<parallel>], iteration_bounds = array<i64: 4>, scalar_prefetch = 0 : i64, scratch_operands = 0 : i64, tpu.core_type = #tpu.core_type<tc>, window_params = [{pipeline_mode = #tpu.pipeline_mode<synchronous>, transform_indices = @transform_0, window_bounds = array<i64: 8, 32>}, {transform_indices = @transform_1, window_bounds = array<i64: 256, 32>}, {pipeline_mode = #tpu.pipeline_mode<synchronous>, transform_indices = @transform_2, window_bounds = array<i64: 8, 1>}, {transform_indices = @transform_3, window_bounds = array<i64: 8, 256>}]} {
    %c0 = arith.constant 0 : index
    %c0_0 = arith.constant 0 : index
    %0 = vector.load %arg1[%c0, %c0_0] : memref<8x32xf32, #tpu.memory_space<vmem>>, vector<8x32xf32>
    %c0_1 = arith.constant 0 : index
    %c0_2 = arith.constant 0 : index
    %1 = vector.load %arg2[%c0_1, %c0_2] : memref<256x32xf32, #tpu.memory_space<vmem>>, vector<256x32xf32>
    %c0_3 = arith.constant 0 : index
    %c0_4 = arith.constant 0 : index
    %2 = vector.load %arg3[%c0_3, %c0_4] : memref<8x1xi32, #tpu.memory_space<vmem>>, vector<8x1xi32>
    %3 = arith.mulf %0, %0 : vector<8x32xf32>
    %cst = arith.constant dense<0.000000e+00> : vector<8xf32>
    %4 = vector.multi_reduction <add>, %3, %cst [1] : vector<8x32xf32> to vector<8xf32>
    %5 = vector.shape_cast %4 : vector<8xf32> to vector<8x1xf32>
    %cst_5 = arith.constant 1.000000e-24 : f32
    %6 = vector.broadcast %cst_5 : f32 to vector<8x1xf32>
    %7 = arith.maximumf %5, %6 : vector<8x1xf32>
    %8 = math.rsqrt %7 : vector<8x1xf32>
    %9 = arith.mulf %1, %1 : vector<256x32xf32>
    %cst_6 = arith.constant 1.000000e+00 : f32
    %10 = vector.broadcast %cst_6 : f32 to vector<1x32xf32>
    %cst_7 = arith.constant dense<0.000000e+00> : vector<1x256xf32>
    %11 = tpu.matmul %10, %9, %cst_7 {dimension_numbers = #tpu.dot_dimension_numbers<[1], [1], [0], [0], [0, 0, 1, 0], [], []>} : vector<1x32xf32>, vector<256x32xf32>, vector<1x256xf32> -> vector<1x256xf32>
    %cst_8 = arith.constant 1.000000e-24 : f32
    %12 = vector.broadcast %cst_8 : f32 to vector<1x256xf32>
    %13 = arith.maximumf %11, %12 : vector<1x256xf32>
    %14 = math.rsqrt %13 : vector<1x256xf32>
    %cst_9 = arith.constant dense<0.000000e+00> : vector<8x256xf32>
    %15 = tpu.matmul %0, %1, %cst_9 {dimension_numbers = #tpu.dot_dimension_numbers<[1], [1], [0], [0], [0, 0, 1, 0], [], []>} : vector<8x32xf32>, vector<256x32xf32>, vector<8x256xf32> -> vector<8x256xf32>
    %16 = vector.broadcast %8 : vector<8x1xf32> to vector<8x256xf32>
    %17 = arith.mulf %15, %16 : vector<8x256xf32>
    %18 = vector.broadcast %14 : vector<1x256xf32> to vector<8x256xf32>
    %19 = arith.mulf %17, %18 : vector<8x256xf32>
    %20 = arith.mulf %19, %19 : vector<8x256xf32>
    %cst_10 = arith.constant 1.000000e+00 : f32
    %21 = vector.broadcast %cst_10 : f32 to vector<8x256xf32>
    %22 = arith.subf %21, %20 : vector<8x256xf32>
    %cst_11 = arith.constant 0.000000e+00 : f32
    %23 = vector.broadcast %cst_11 : f32 to vector<8x256xf32>
    %24 = arith.maximumf %22, %23 : vector<8x256xf32>
    %25 = math.sqrt %24 : vector<8x256xf32>
    %cst_12 = arith.constant 0.87758255 : f32
    %26 = vector.broadcast %cst_12 : f32 to vector<8x256xf32>
    %27 = arith.mulf %19, %26 : vector<8x256xf32>
    %cst_13 = arith.constant 0.47942555 : f32
    %28 = vector.broadcast %cst_13 : f32 to vector<8x256xf32>
    %29 = arith.mulf %25, %28 : vector<8x256xf32>
    %30 = arith.subf %27, %29 : vector<8x256xf32>
    %cst_14 = arith.constant -0.87758255 : f32
    %31 = vector.broadcast %cst_14 : f32 to vector<8x256xf32>
    %32 = arith.cmpf ogt, %19, %31 : vector<8x256xf32>
    %cst_15 = arith.constant 0.239712775 : f32
    %33 = vector.broadcast %cst_15 : f32 to vector<8x256xf32>
    %34 = arith.subf %19, %33 : vector<8x256xf32>
    %35 = arith.select %32, %30, %34 : vector<8x256xi1>, vector<8x256xf32>
    %c256_i32 = arith.constant 256 : i32
    %36 = arith.muli %arg0, %c256_i32 : i32
    %37 = tpu.iota {dimensions = array<i32: 1>} : vector<8x256xi32>
    %38 = vector.broadcast %36 : i32 to vector<8x256xi32>
    %39 = arith.addi %38, %37 : vector<8x256xi32>
    %40 = vector.broadcast %2 : vector<8x1xi32> to vector<8x256xi32>
    %41 = arith.cmpi eq, %39, %40 : vector<8x256xi32>
    %42 = arith.select %41, %35, %19 : vector<8x256xi1>, vector<8x256xf32>
    %cst_16 = arith.constant 3.000000e+01 : f32
    %43 = vector.broadcast %cst_16 : f32 to vector<8x256xf32>
    %44 = arith.mulf %42, %43 : vector<8x256xf32>
    %c0_17 = arith.constant 0 : index
    %c0_18 = arith.constant 0 : index
    %45 = vector.load %arg4[%c0_17, %c0_18] : memref<8x256xf32, #tpu.memory_space<vmem>>, vector<8x256xf32>
    tpu.vector_store %arg4[%c0_17, %c0_18], %44 {strides = array<i32>} : memref<8x256xf32, #tpu.memory_space<vmem>>, vector<8x256xf32>,
    return
  }
  func.func @transform_0(%arg0: i32) -> (i32, i32) {
    %c0_i32 = arith.constant 0 : i32
    %c0_i32_0 = arith.constant 0 : i32
    %c0_i32_1 = arith.constant 0 : i32
    return %c0_i32, %c0_i32_0 : i32, i32
  }
  func.func @transform_1(%arg0: i32) -> (i32, i32) {
    %c0_i32 = arith.constant 0 : i32
    %c0_i32_0 = arith.constant 0 : i32
    return %arg0, %c0_i32 : i32, i32
  }
  func.func @transform_2(%arg0: i32) -> (i32, i32) {
    %c0_i32 = arith.constant 0 : i32
    %c0_i32_0 = arith.constant 0 : i32
    %c0_i32_1 = arith.constant 0 : i32
    return %c0_i32, %c0_i32_0 : i32, i32
  }
  func.func @transform_3(%arg0: i32) -> (i32, i32) {
    %c0_i32 = arith.constant 0 : i32
    %c0_i32_0 = arith.constant 0 : i32
    return %c0_i32, %arg0 : i32, i32
  }
}

</mosaic_0001>

<llo_original>
// kernel: tpu_custom_call.1
$region0: #{tpu_custom_call.1}
  #allocation0 [shape = 'u32[]', space=smem, size = 0x4, offset = 0x4, fixed_abs, tag = 'smem constant byte address 0x4 - core index']
  #allocation1 [shape = 'u32[72,128]{1,0:T(1,128)}', space=vmem, size = 0x9000, scoped, tag = 'internal scratch']
  %s0 = inlined_call_operand.vmem [shape: f32[8,32], index: 0, kind: input, shape index: {}]
  %s1 = inlined_call_operand.vmem [shape: f32[1024,32], index: 1, kind: input, shape index: {}]
  %s2 = inlined_call_operand.vmem [shape: s32[8,1], index: 2, kind: input, shape index: {}]
  %s3 = inlined_call_operand.hbm [shape: f32[8,1024], index: 3, kind: output, shape index: {}]
  %s4 = sld [smem:[#allocation0]]
  $region45: #{tpu_custom_call.1} parent=0
    _
  %s6 = ssub.s32 1, %s4
  %s7 = scalar_select 0, %s6, %s4
  $region1: #{tpu_custom_call.1} parent=0
    #allocation2 [shape = 'u8[16384]{0}', space=vmem, size = 0x4000, scoped, tag = 'output window, operand 0']
    #allocation3 [shape = 's32[2]{0}', space=sflag, size = 0x8, scoped, tag = 'scoped memory for tpu_custom_call.1']
    %8 = vsyncpa [#allocation3], 0
    %s9 = scalar_lea.sflag [#allocation3], 1
    %10 = vsyncpa %s9, 0
    loop: start=0, step=1, limit=6
    $region2: #{tpu_custom_call.1} parent=1 // loop_pre_header
      _
    $region3: #{tpu_custom_call.1} parent=1 // loop_header
      %s12 = sphi 0, %s16
      %p13 = scmp.ge.s32.totalorder %s12, 6
      %s20 = sphi 0, %s20
      %s22 = sphi 0, %s20
      %s23 = sphi 0, %s22
      %s37 = sphi 0, %s23
      %s43 = sphi 0, %s45
      %s46 = sphi 0, %s43
      %s47 = sphi 0, %s46
      %s63 = sphi 0, %s47
      %s67 = sphi 0, %s67
      %s69 = sphi 0, %s67
      %s70 = sphi 0, %s69
      %s84 = sphi 0, %s70
      %s90 = sphi 0, %s92
      %s93 = sphi 0, %s90
      %s94 = sphi 0, %s93
      %s110 = sphi 0, %s94
    $region4: #{tpu_custom_call.1} parent=1 // loop_header_branch
      %15 = sbr.rel (%p13) target = $region8
    $region5: #{tpu_custom_call.1} parent=1 // loop_body
      %s17 = ssub.s32 %s12, 1
      %s18 = ssub.s32 %s12, 2
      %s19 = sadd.s32 %s12, 1
      %s21 = sadd.s32 %s20, 1
      %p24 = scmp.eq.s32.totalorder %s12, 3
      %p25 = scmp.ne.s32.totalorder %s20, %s22
      %p26 = scmp.eq.s32.totalorder %s12, 0
      %p27 = por %p25, %p26
      %p28 = scmp.ne.s32.totalorder %s20, %s22
      %p29 = scmp.eq.s32.totalorder %s17, 3
      %p30 = por %p28, %p29
      %p31 = scmp.ne.s32.totalorder %s22, %s23
      %p32 = scmp.eq.s32.totalorder %s17, 0
      %p33 = por %p31, %p32
      %p34 = scmp.ne.s32.totalorder %s22, %s23
      %p35 = scmp.eq.s32.totalorder %s18, 3
      %p36 = por %p34, %p35
      %p38 = scmp.ne.s32.totalorder %s23, %s37
      %p39 = scmp.eq.s32.totalorder %s18, 0
      %p40 = por %p38, %p39
      %s41 = ssub.s32 %s12, %s19
      %p42 = scmp.eq.s32.totalorder %s41, 0
      %s44 = sadd.s32 %s43, 1
      %s45 = scalar_select %p42, %s43, %s44
      %p48 = pneg %p42
      %p49 = scmp.eq.s32.totalorder %s12, 3
      %p50 = por %p48, %p49
      %p51 = scmp.ne.s32.totalorder %s43, %s46
      %p52 = scmp.eq.s32.totalorder %s12, 0
      %p53 = por %p51, %p52
      %p54 = scmp.ne.s32.totalorder %s43, %s46
      %p55 = scmp.eq.s32.totalorder %s17, 3
      %p56 = por %p54, %p55
      %p57 = scmp.ne.s32.totalorder %s46, %s47
      %p58 = scmp.eq.s32.totalorder %s17, 0
      %p59 = por %p57, %p58
      %p60 = scmp.ne.s32.totalorder %s46, %s47
      %p61 = scmp.eq.s32.totalorder %s18, 3
      %p62 = por %p60, %p61
      %p64 = scmp.ne.s32.totalorder %s47, %s63
      %p65 = scmp.eq.s32.totalorder %s18, 0
      %p66 = por %p64, %p65
      %s68 = sadd.s32 %s67, 1
      %p71 = scmp.eq.s32.totalorder %s12, 3
      %p72 = scmp.ne.s32.totalorder %s67, %s69
      %p73 = scmp.eq.s32.totalorder %s12, 0
      %p74 = por %p72, %p73
      %p75 = scmp.ne.s32.totalorder %s67, %s69
      %p76 = scmp.eq.s32.totalorder %s17, 3
      %p77 = por %p75, %p76
      %p78 = scmp.ne.s32.totalorder %s69, %s70
      %p79 = scmp.eq.s32.totalorder %s17, 0
      %p80 = por %p78, %p79
      %p81 = scmp.ne.s32.totalorder %s69, %s70
      %p82 = scmp.eq.s32.totalorder %s18, 3
      %p83 = por %p81, %p82
      %p85 = scmp.ne.s32.totalorder %s70, %s84
      %p86 = scmp.eq.s32.totalorder %s18, 0
      %p87 = por %p85, %p86
      %s88 = ssub.s32 %s12, %s19
      %p89 = scmp.eq.s32.totalorder %s88, 0
      %s91 = sadd.s32 %s90, 1
      %s92 = scalar_select %p89, %s90, %s91
      %p95 = pneg %p89
      %p96 = scmp.eq.s32.totalorder %s12, 3
      %p97 = por %p95, %p96
      %p98 = scmp.ne.s32.totalorder %s90, %s93
      %p99 = scmp.eq.s32.totalorder %s12, 0
      %p100 = por %p98, %p99
      %p101 = scmp.ne.s32.totalorder %s90, %s93
      %p102 = scmp.eq.s32.totalorder %s17, 3
      %p103 = por %p101, %p102
      %p104 = scmp.ne.s32.totalorder %s93, %s94
      %p105 = scmp.eq.s32.totalorder %s17, 0
      %p106 = por %p104, %p105
      %p107 = scmp.ne.s32.totalorder %s93, %s94
      %p108 = scmp.eq.s32.totalorder %s18, 3
      %p109 = por %p107, %p108
      %p111 = scmp.ne.s32.totalorder %s94, %s110
      %p112 = scmp.eq.s32.totalorder %s18, 0
      %p113 = por %p111, %p112
      %p114 = scmp.le.s32.totalorder 1, %s12
      %p115 = scmp.lt.s32.totalorder %s12, 5
      %p116 = pnand %p114, %p115
      %p117 = pneg %p116
      // Predicated region
      $region9: #{tpu_custom_call.1} parent=5 // pred_check
        _
      $region10: #{tpu_custom_call.1} parent=5 // pred_check_branch
        %119 = sbr.rel (%p116) target = $region12
      $region11: #{tpu_custom_call.1} parent=5 // pred_region
        %s120 = ssub.s32 %s12, 1
        // Predicated region
        $region13: #{tpu_custom_call.1} parent=11 // pred_check
          %p121 = pneg %p33
        $region14: #{tpu_custom_call.1} parent=11 // pred_check_branch
          %123 = sbr.rel (%p121) target = $region16
        $region15: #{tpu_custom_call.1} parent=11 // pred_region
          _
        $region16: #{tpu_custom_call.1} parent=11 // pred_fallthru
          _
        // Predicated region
        $region17: #{tpu_custom_call.1} parent=11 // pred_check
          %p124 = pneg %p80
        $region18: #{tpu_custom_call.1} parent=11 // pred_check_branch
          %126 = sbr.rel (%p124) target = $region20
        $region19: #{tpu_custom_call.1} parent=11 // pred_region
          _
        $region20: #{tpu_custom_call.1} parent=11 // pred_fallthru
          _
      $region12: #{tpu_custom_call.1} parent=5 // pred_fallthru
        _
      %p127 = scmp.lt.s32.totalorder %s12, 4
      // Predicated region
      $region21: #{tpu_custom_call.1} parent=5 // pred_check
        %p128 = pneg %p127
      $region22: #{tpu_custom_call.1} parent=5 // pred_check_branch
        %130 = sbr.rel (%p128) target = $region24
      $region23: #{tpu_custom_call.1} parent=5 // pred_region
        // Predicated region
        $region25: #{tpu_custom_call.1} parent=23 // pred_check
          %p131 = pneg %p53
        $region26: #{tpu_custom_call.1} parent=23 // pred_check_branch
          %133 = sbr.rel (%p131) target = $region28
        $region27: #{tpu_custom_call.1} parent=23 // pred_region
          %s134 = smul.u32 32, %s12
          %p135 = scmp.lt.s32.totalorder %s134, 127
          %s136 = scalar_select %p135, %s134, 127
          %s137 = smul.addr %s136, 8
          %s138 = scalar_lea.vmem %s1, %s137
          %s139 = smul.u32 32, %s12
        $region28: #{tpu_custom_call.1} parent=23 // pred_fallthru
          _
      $region24: #{tpu_custom_call.1} parent=5 // pred_fallthru
        _
      %p140 = scmp.le.s32.totalorder 1, %s12
      %p141 = scmp.lt.s32.totalorder %s12, 5
      %p142 = pnand %p140, %p141
      %p143 = pneg %p142
      // Predicated region
      $region29: #{tpu_custom_call.1} parent=5 // pred_check
        _
      $region30: #{tpu_custom_call.1} parent=5 // pred_check_branch
        %145 = sbr.rel (%p142) target = $region32
      $region31: #{tpu_custom_call.1} parent=5 // pred_region
        %s146 = ssub.s32 %s12, 1
        %p147 = pneg %p33
        %p148 = pneg %p30
        %s149 = smul.u32 32, %s17
        %p150 = scmp.lt.s32.totalorder %s149, 127
        %s151 = scalar_select %p150, %s149, 127
        %s152 = smul.addr %s151, 8
        %s153 = scalar_lea.vmem %s1, %s152
        %p154 = pneg %p59
        %p155 = pneg %p56
        %p156 = pneg %p80
        %p157 = pneg %p77
        %p158 = pneg %p106
        %p159 = pneg %p103
        %s160 = sand.u32 %s93, 1
        %s161 = scalar_lea.sflag [#allocation3], %s160
        %s162 = sand.u32 %s93, 1
        %s163 = smul.addr %s162, 16
        %s164 = scalar_lea.vmem [#allocation2], %s163
        %s165 = smul.u32 32, %s17
        %p166 = scmp.lt.s32.totalorder %s165, 127
        %s167 = scalar_select %p166, %s165, 127
        %s168 = smul.addr %s167, 8
        %s169 = scalar_lea.vmem %s1, %s168
        %s170 = smul.u32 32, %s17
        %s171 = smul.u32 2, %s17
        %v172 = vld [vmem:[%s0] sm:$0xff]
        %v173 = vld [vmem:[%s169] sm:$0xff]
        %v174 = vld [vmem:[%s169 + $0x8] sm:$0xff]
        %v175 = vld [vmem:[%s169 + $0x10] sm:$0xff]
        %v176 = vld [vmem:[%s169 + $0x18] sm:$0xff]
        %v177 = vld [vmem:[%s169 + $0x20] sm:$0xff]
        %v178 = vld [vmem:[%s169 + $0x28] sm:$0xff]
        %v179 = vld [vmem:[%s169 + $0x30] sm:$0xff]
        %v180 = vld [vmem:[%s169 + $0x38] sm:$0xff]
        %v181 = vld [vmem:[%s169 + $0x40] sm:$0xff]
        %v182 = vld [vmem:[%s169 + $0x48] sm:$0xff]
        %v183 = vld [vmem:[%s169 + $0x50] sm:$0xff]
        %v184 = vld [vmem:[%s169 + $0x58] sm:$0xff]
        %v185 = vld [vmem:[%s169 + $0x60] sm:$0xff]
        %v186 = vld [vmem:[%s169 + $0x68] sm:$0xff]
        %v187 = vld [vmem:[%s169 + $0x70] sm:$0xff]
        %v188 = vld [vmem:[%s169 + $0x78] sm:$0xff]
        %v189 = vld [vmem:[%s169 + $0x80] sm:$0xff]
        %v190 = vld [vmem:[%s169 + $0x88] sm:$0xff]
        %v191 = vld [vmem:[%s169 + $0x90] sm:$0xff]
        %v192 = vld [vmem:[%s169 + $0x98] sm:$0xff]
        %v193 = vld [vmem:[%s169 + $0xa0] sm:$0xff]
        %v194 = vld [vmem:[%s169 + $0xa8] sm:$0xff]
        %v195 = vld [vmem:[%s169 + $0xb0] sm:$0xff]
        %v196 = vld [vmem:[%s169 + $0xb8] sm:$0xff]
        %v197 = vld [vmem:[%s169 + $0xc0] sm:$0xff]
        %v198 = vld [vmem:[%s169 + $0xc8] sm:$0xff]
        %v199 = vld [vmem:[%s169 + $0xd0] sm:$0xff]
        %v200 = vld [vmem:[%s169 + $0xd8] sm:$0xff]
        %v201 = vld [vmem:[%s169 + $0xe0] sm:$0xff]
        %v202 = vld [vmem:[%s169 + $0xe8] sm:$0xff]
        %v203 = vld [vmem:[%s169 + $0xf0] sm:$0xff]
        %v204 = vld [vmem:[%s169 + $0xf8] sm:$0xff]
        %v205 = vld [vmem:[%s2] sm:$0xff]
        %v206 = vmul.f32 %v172, %v172
        %vm207 = vcmask 261120
        %v208 = vsel %vm207, %v206, 0.0
        %209 = vadd.xlane.f32.xlu0 %v208
        %v210 = vpop.xlane.xlu0 %209
        %v211 = vmax.f32 %v210, 1e-24
        %v212 = vrsqrt.pop %v211
        %v213 = vmul.f32 %v212, %v211
        %v214 = vmul.f32 %v213, %v212
        %v215 = vmul.f32 0.5, %v214
        %v216 = vsub.f32 1.5, %v215
        %v217 = vmul.f32 %v212, %v216
        %vm218 = vweird.f32 %v211
        %vm219 = vweird.f32 %v212
        %vm220 = vmor %vm218, %vm219
        %v221 = vsel %vm220, %v212, %v217
        %v222 = vmul.f32 %v173, %v173
        %v223 = vmul.f32 %v174, %v174
        %v224 = vmul.f32 %v175, %v175
        %v225 = vmul.f32 %v176, %v176
        %v226 = vmul.f32 %v177, %v177
        %v227 = vmul.f32 %v178, %v178
        %v228 = vmul.f32 %v179, %v179
        %v229 = vmul.f32 %v180, %v180
        %v230 = vmul.f32 %v181, %v181
        %v231 = vmul.f32 %v182, %v182
        %v232 = vmul.f32 %v183, %v183
        %v233 = vmul.f32 %v184, %v184
        %v234 = vmul.f32 %v185, %v185
        %v235 = vmul.f32 %v186, %v186
        %v236 = vmul.f32 %v187, %v187
        %v237 = vmul.f32 %v188, %v188
        %v238 = vmul.f32 %v189, %v189
        %v239 = vmul.f32 %v190, %v190
        %v240 = vmul.f32 %v191, %v191
        %v241 = vmul.f32 %v192, %v192
        %v242 = vmul.f32 %v193, %v193
        %v243 = vmul.f32 %v194, %v194
        %v244 = vmul.f32 %v195, %v195
        %v245 = vmul.f32 %v196, %v196
        %v246 = vmul.f32 %v197, %v197
        %v247 = vmul.f32 %v198, %v198
        %v248 = vmul.f32 %v199, %v199
        %v249 = vmul.f32 %v200, %v200
        %v250 = vmul.f32 %v201, %v201
        %v251 = vmul.f32 %v202, %v202
        %v252 = vmul.f32 %v203, %v203
        %v253 = vmul.f32 %v204, %v204
        %v255 = vsel %vm207, 1.0, 0
        %v258 = vsel %vm207, %v222, 0
        %v261 = vsel %vm207, %v223, 0
        %v264 = vsel %vm207, %v224, 0
        %v267 = vsel %vm207, %v225, 0
        %v270 = vsel %vm207, %v226, 0
        %v273 = vsel %vm207, %v227, 0
        %v276 = vsel %vm207, %v228, 0
        %v279 = vsel %vm207, %v229, 0
        %v282 = vsel %vm207, %v230, 0
        %v285 = vsel %vm207, %v231, 0
        %v288 = vsel %vm207, %v232, 0
        %v291 = vsel %vm207, %v233, 0
        %v294 = vsel %vm207, %v234, 0
        %v297 = vsel %vm207, %v235, 0
        %v300 = vsel %vm207, %v236, 0
        %v303 = vsel %vm207, %v237, 0
        %v306 = vsel %vm207, %v238, 0
        %v309 = vsel %vm207, %v239, 0
        %v312 = vsel %vm207, %v240, 0
        %v315 = vsel %vm207, %v241, 0
        %v318 = vsel %vm207, %v242, 0
        %v321 = vsel %vm207, %v243, 0
        %v324 = vsel %vm207, %v244, 0
        %v327 = vsel %vm207, %v245, 0
        %v330 = vsel %vm207, %v246, 0
        %v333 = vsel %vm207, %v247, 0
        %v336 = vsel %vm207, %v248, 0
        %v339 = vsel %vm207, %v249, 0
        %v342 = vsel %vm207, %v250, 0
        %v345 = vsel %vm207, %v251, 0
        %v348 = vsel %vm207, %v252, 0
        %v351 = vsel %vm207, %v253, 0
        %353 = vmatpush.xpose.msra.mxu0 %v303
        %354 = vmatpush.xpose.msra.mxu0 %v300
        %355 = vmatpush.xpose.msra.mxu0 %v297
        %356 = vmatpush.xpose.msra.mxu0 %v294
        %357 = vmatpush.xpose.msra.mxu0 %v291
        %358 = vmatpush.xpose.msra.mxu0 %v288
        %359 = vmatpush.xpose.msra.mxu0 %v285
        %360 = vmatpush.xpose.msra.mxu0 %v282
        %361 = vmatpush.xpose.msra.mxu0 %v279
        %362 = vmatpush.xpose.msra.mxu0 %v276
        %363 = vmatpush.xpose.msra.mxu0 %v273
        %364 = vmatpush.xpose.msra.mxu0 %v270
        %365 = vmatpush.xpose.msra.mxu0 %v267
        %366 = vmatpush.xpose.msra.mxu0 %v264
        %367 = vmatpush.xpose.msra.mxu0 %v261
        %368 = vmatpush.xpose.msra.mxu0 %v258
        %369 = vmatmul.f32.gmra.mxu0 %v255
        %v370 = vpop.f32.mrf.mxu0
        %v371 = vadd.f32 0.0, %v370
        %372 = vdwg.mxu0
        %373 = vmatpush.xpose.msra.mxu0 %v351
        %374 = vmatpush.xpose.msra.mxu0 %v348
        %375 = vmatpush.xpose.msra.mxu0 %v345
        %376 = vmatpush.xpose.msra.mxu0 %v342
        %377 = vmatpush.xpose.msra.mxu0 %v339
        %378 = vmatpush.xpose.msra.mxu0 %v336
        %379 = vmatpush.xpose.msra.mxu0 %v333
        %380 = vmatpush.xpose.msra.mxu0 %v330
        %381 = vmatpush.xpose.msra.mxu0 %v327
        %382 = vmatpush.xpose.msra.mxu0 %v324
        %383 = vmatpush.xpose.msra.mxu0 %v321
        %384 = vmatpush.xpose.msra.mxu0 %v318
        %385 = vmatpush.xpose.msra.mxu0 %v315
        %386 = vmatpush.xpose.msra.mxu0 %v312
        %387 = vmatpush.xpose.msra.mxu0 %v309
        %388 = vmatpush.xpose.msra.mxu0 %v306
        %389 = vmatmul.f32.gmra.mxu0 %v255
        %v390 = vpop.f32.mrf.mxu0
        %v391 = vadd.f32 0.0, %v390
        %392 = vdwg.mxu0
        %v393 = vmax.f32 %v371, 1e-24
        %v394 = vmax.f32 %v391, 1e-24
        %v395 = vrsqrt.pop %v393
        %v396 = vmul.f32 %v395, %v393
        %v397 = vmul.f32 %v396, %v395
        %v398 = vmul.f32 0.5, %v397
        %v399 = vsub.f32 1.5, %v398
        %v400 = vmul.f32 %v395, %v399
        %vm401 = vweird.f32 %v393
        %vm402 = vweird.f32 %v395
        %vm403 = vmor %vm401, %vm402
        %v404 = vsel %vm403, %v395, %v400
        %v405 = vrsqrt.pop %v394
        %v406 = vmul.f32 %v405, %v394
        %v407 = vmul.f32 %v406, %v405
        %v408 = vmul.f32 0.5, %v407
        %v409 = vsub.f32 1.5, %v408
        %v410 = vmul.f32 %v405, %v409
        %vm411 = vweird.f32 %v394
        %vm412 = vweird.f32 %v405
        %vm413 = vmor %vm411, %vm412
        %v414 = vsel %vm413, %v405, %v410
        %v416 = vsel %vm207, %v172, 0
        %v419 = vsel %vm207, %v173, 0
        %v422 = vsel %vm207, %v174, 0
        %v425 = vsel %vm207, %v175, 0
        %v428 = vsel %vm207, %v176, 0
        %v431 = vsel %vm207, %v177, 0
        %v434 = vsel %vm207, %v178, 0
        %v437 = vsel %vm207, %v179, 0
        %v440 = vsel %vm207, %v180, 0
        %v443 = vsel %vm207, %v181, 0
        %v446 = vsel %vm207, %v182, 0
        %v449 = vsel %vm207, %v183, 0
        %v452 = vsel %vm207, %v184, 0
        %v455 = vsel %vm207, %v185, 0
        %v458 = vsel %vm207, %v186, 0
        %v461 = vsel %vm207, %v187, 0
        %v464 = vsel %vm207, %v188, 0
        %v467 = vsel %vm207, %v189, 0
        %v470 = vsel %vm207, %v190, 0
        %v473 = vsel %vm207, %v191, 0
        %v476 = vsel %vm207, %v192, 0
        %v479 = vsel %vm207, %v193, 0
        %v482 = vsel %vm207, %v194, 0
        %v485 = vsel %vm207, %v195, 0
        %v488 = vsel %vm207, %v196, 0
        %v491 = vsel %vm207, %v197, 0
        %v494 = vsel %vm207, %v198, 0
        %v497 = vsel %vm207, %v199, 0
        %v500 = vsel %vm207, %v200, 0
        %v503 = vsel %vm207, %v201, 0
        %v506 = vsel %vm207, %v202, 0
        %v509 = vsel %vm207, %v203, 0
        %v512 = vsel %vm207, %v204, 0
        %514 = vmatpush.xpose.msra.mxu0 %v464
        %515 = vmatpush.xpose.msra.mxu0 %v461
        %516 = vmatpush.xpose.msra.mxu0 %v458
        %517 = vmatpush.xpose.msra.mxu0 %v455
        %518 = vmatpush.xpose.msra.mxu0 %v452
        %519 = vmatpush.xpose.msra.mxu0 %v449
        %520 = vmatpush.xpose.msra.mxu0 %v446
        %521 = vmatpush.xpose.msra.mxu0 %v443
        %522 = vmatpush.xpose.msra.mxu0 %v440
        %523 = vmatpush.xpose.msra.mxu0 %v437
        %524 = vmatpush.xpose.msra.mxu0 %v434
        %525 = vmatpush.xpose.msra.mxu0 %v431
        %526 = vmatpush.xpose.msra.mxu0 %v428
        %527 = vmatpush.xpose.msra.mxu0 %v425
        %528 = vmatpush.xpose.msra.mxu0 %v422
        %529 = vmatpush.xpose.msra.mxu0 %v419
        %530 = vmatmul.f32.gmra.mxu0 %v416
        %v531 = vpop.f32.mrf.mxu0
        %v532 = vadd.f32 0.0, %v531
        %533 = vdwg.mxu0
        %534 = vmatpush.xpose.msra.mxu0 %v512
        %535 = vmatpush.xpose.msra.mxu0 %v509
        %536 = vmatpush.xpose.msra.mxu0 %v506
        %537 = vmatpush.xpose.msra.mxu0 %v503
        %538 = vmatpush.xpose.msra.mxu0 %v500
        %539 = vmatpush.xpose.msra.mxu0 %v497
        %540 = vmatpush.xpose.msra.mxu0 %v494
        %541 = vmatpush.xpose.msra.mxu0 %v491
        %542 = vmatpush.xpose.msra.mxu0 %v488
        %543 = vmatpush.xpose.msra.mxu0 %v485
        %544 = vmatpush.xpose.msra.mxu0 %v482
        %545 = vmatpush.xpose.msra.mxu0 %v479
        %546 = vmatpush.xpose.msra.mxu0 %v476
        %547 = vmatpush.xpose.msra.mxu0 %v473
        %548 = vmatpush.xpose.msra.mxu0 %v470
        %549 = vmatpush.xpose.msra.mxu0 %v467
        %550 = vmatmul.f32.gmra.mxu0 %v416
        %v551 = vpop.f32.mrf.mxu0
        %v552 = vadd.f32 0.0, %v551
        %553 = vdwg.mxu0
        %v554 = vmul.f32 %v532, %v221
        %v555 = vmul.f32 %v552, %v221
        %v556 = vperm.slane %v404, 0
        %v557 = vperm.slane %v414, 0
        %v558 = vmul.f32 %v554, %v556
        %v559 = vmul.f32 %v555, %v557
        %v560 = vmul.f32 %v558, %v558
        %v561 = vmul.f32 %v559, %v559
        %v562 = vsub.f32 1.0, %v560
        %v563 = vsub.f32 1.0, %v561
        %v564 = vmax.f32 %v562, 0.0
        %v565 = vmax.f32 %v563, 0.0
        %v566 = vrsqrt.pop %v564
        %v567 = vmul.f32 %v566, %v564
        %v568 = vmul.f32 %v567, %v566
        %v569 = vmul.f32 0.5, %v568
        %v570 = vsub.f32 1.5, %v569
        %v571 = vmul.f32 %v566, %v570
        %v572 = vmul.f32 %v564, %v571
        %vm573 = vcmp.eq.f32.partialorder %v564, inf
        %v574 = vsel %vm573, %v564, %v572
        %vm575 = vcmp.eq.f32.partialorder %v564, 0.0
        %v576 = vand.u32 %v564, 2147483648
        %v577 = vsel %vm575, %v576, %v574
        %v578 = vrsqrt.pop %v565
        %v579 = vmul.f32 %v578, %v565
        %v580 = vmul.f32 %v579, %v578
        %v581 = vmul.f32 0.5, %v580
        %v582 = vsub.f32 1.5, %v581
        %v583 = vmul.f32 %v578, %v582
        %v584 = vmul.f32 %v565, %v583
        %vm585 = vcmp.eq.f32.partialorder %v565, inf
        %v586 = vsel %vm585, %v565, %v584
        %vm587 = vcmp.eq.f32.partialorder %v565, 0.0
        %v588 = vand.u32 %v565, 2147483648
        %v589 = vsel %vm587, %v588, %v586
        %v590 = vmul.f32 %v558, 0.87758255
        %v591 = vmul.f32 %v559, 0.87758255
        %v592 = vmul.f32 %v577, 0.47942555
        %v593 = vmul.f32 %v589, 0.47942555
        %v594 = vsub.f32 %v590, %v592
        %v595 = vsub.f32 %v591, %v593
        %vm596 = vcmp.gt.f32.partialorder %v558, -0.87758255
        %vm597 = vcmp.gt.f32.partialorder %v559, -0.87758255
        %v598 = vsub.f32 %v558, 0.23971277
        %v599 = vsub.f32 %v559, 0.23971277
        %v600 = vsel %vm596, %v594, %v598
        %v601 = vsel %vm597, %v595, %v599
        %s602 = smul.u32 %s17, 256
        %v603 = vlaneseq
        %v604 = vand.u32 %v603, 127
        %v605 = vadd.s32 %v604, 128
        %v606 = vstv %s602
        %v607 = vadd.s32 %v606, %v604
        %v608 = vadd.s32 %v606, %v605
        %609 = vset.pattern.permute.xlu0 0
        %610 = vperm.xlu0 %609, %v205
        %v611 = vpop.permute.xlu0 %610
        %vm612 = vcmp.eq.s32.totalorder %v607, %v611
        %vm613 = vcmp.eq.s32.totalorder %v608, %v611
        %v614 = vsel %vm612, %v600, %v558
        %v615 = vsel %vm613, %v601, %v559
        %v616 = vmul.f32 %v614, 30.0
        %v617 = vmul.f32 %v615, 30.0
        %618 = vst [vmem:[%s164] sm:$0xff] %v616
        %619 = vst [vmem:[%s164 + $0x8] sm:$0xff] %v617
        %s620 = sand.u32 %s93, 1
        %s621 = scalar_lea.sflag [#allocation3], %s620
        %s622 = sand.u32 %s93, 1
        %s623 = smul.addr %s622, 16
        %s624 = scalar_lea.vmem [#allocation2], %s623
        // Predicated region
        $region33: #{tpu_custom_call.1} parent=31 // pred_check
          %p625 = pneg %p103
        $region34: #{tpu_custom_call.1} parent=31 // pred_check_branch
          %627 = sbr.rel (%p625) target = $region36
        $region35: #{tpu_custom_call.1} parent=31 // pred_region
          %s628 = smul.u32 2, %s17
          %630 = vsyncadd %s621, 0
          %s631 = smul.addr %s628, 8
          %s632 = scalar_lea.hbm %s3, %s631
          %s634 = sshll.u32 %s624, 4
          %s635 = int_to_ptr.vmem [resolvable:$true] %s634
          %s636 = sshll.u32 %s632, 4
          %s637 = int_to_ptr.hbm [resolvable:$true] %s636
          %639 = dma.vmem_to_hbm [thread:$0]  %s635, 256, %s637, %s621
        $region36: #{tpu_custom_call.1} parent=31 // pred_fallthru
          _
      $region32: #{tpu_custom_call.1} parent=5 // pred_fallthru
        _
      %p640 = scmp.le.s32.totalorder 2, %s12
      // Predicated region
      $region37: #{tpu_custom_call.1} parent=5 // pred_check
        %p641 = pneg %p640
      $region38: #{tpu_custom_call.1} parent=5 // pred_check_branch
        %643 = sbr.rel (%p641) target = $region40
      $region39: #{tpu_custom_call.1} parent=5 // pred_region
        %s644 = ssub.s32 %s12, 2
        // Predicated region
        $region41: #{tpu_custom_call.1} parent=39 // pred_check
          %p645 = pneg %p109
        $region42: #{tpu_custom_call.1} parent=39 // pred_check_branch
          %647 = sbr.rel (%p645) target = $region44
        $region43: #{tpu_custom_call.1} parent=39 // pred_region
          %s648 = sand.u32 %s94, 1
          %s649 = scalar_lea.sflag [#allocation3], %s648
          %s650 = sand.u32 %s94, 1
          %s651 = smul.addr %s650, 16
          %s652 = scalar_lea.vmem [#allocation2], %s651
          %654 = dma.done %s649, 256
        $region44: #{tpu_custom_call.1} parent=39 // pred_fallthru
          _
      $region40: #{tpu_custom_call.1} parent=5 // pred_fallthru
        _
    $region6: #{tpu_custom_call.1} parent=1 // loop_footer
      %s16 = sadd.s32 1, %s12
    $region7: #{tpu_custom_call.1} parent=1 // loop_footer_branch
      %11 = sbr.rel target = $region3
    $region8: #{tpu_custom_call.1} parent=1 // loop_exit
      _
    %655 = vsyncpa [#allocation3], 1
    %s656 = scalar_lea.sflag [#allocation3], 1
    %657 = vsyncpa %s656, 1

</llo_original>
